<compile_context>
chip_gen: v7x
topology: tpu7x:2x2x1
jax: 0.10.0
libtpu: 0.0.40
codegen_flags: <defaults>
</compile_context>

<pallas_src>
import jax
import jax.numpy as jnp
from jax.experimental import pallas as pl
from jax.experimental.pallas import tpu as pltpu


LANE = 128      # vreg lane width  (minormost tile dim)
SUBLANE = 8     # vreg sublane width (second-minor tile dim)


def _round_up(v, m):
    return (v + m - 1) // m * m


def _vmem_limits():
    """Returns (vmem_limit_bytes for CompilerParams, per-step block budget)."""
    try:
        cap = int(pltpu.get_tpu_info().vmem_capacity_bytes)  # 128 MiB v5e/v6e, 64 MiB v7x
    except Exception:
        cap = 64 << 20                                       # conservative fallback
    limit = min(cap // 2, 64 << 20)    # v5e/v6e: 64 MiB, v7x: 32 MiB
    budget = limit // 2                # headroom for Mosaic internal scratch
    return limit, budget


def _block_bytes(C, O, tf):
    """VMEM bytes of one grid step: double buffering + sublane padding included."""
    c_p = _round_up(C, SUBLANE)        # a (C, tf) f32 slab occupies (c_p, tf) tiles
    o_p = _round_up(O, SUBLANE)
    inp = 2 * 4 * c_p * tf * 4         # double-buffered gathered (1,4,C,tf) block
    outp = 2 * o_p * tf * 4            # double-buffered (1,O,tf) output block
    wts = 2 * (2 * o_p * _round_up(C, LANE) + o_p * LANE) * 4   # w0, w1, shift
    tmps = (2 * c_p + 2 * o_p) * tf * 4  # beta / acc / epilogue temporaries
    return inp + outp + wts + tmps


def _select_face_tile(B, C, O, F, budget):
    """Largest lane-dense face tile whose full VMEM budget fits."""
    if F <= LANE:
        return F                       # full-dim block (allowed for any F)
    tf = min(8192, (F // LANE) * LANE)  # big tiles -> few grid steps, big DMAs
    while tf > LANE and _block_bytes(C, O, tf) > budget:
        tf = max(LANE, ((tf // 2) // LANE) * LANE)
    if B == 1 and F >= 2 * LANE:
        # keep at least 2 face tiles so both v7x TensorCores get work
        tf = min(tf, _round_up(pl.cdiv(F, 2), LANE))
    return tf


def meshconv_kernel(g_ref, w0_ref, w1_ref, shift_ref, o_ref):
    # g_ref: (1, 4, C, TF) neighbor-major gathered features
    # w0_ref/w1_ref: (O, C) BN-folded conv taps, shift_ref: (O, 1) folded bias
    # o_ref: (1, O, TF) lane-dense output
    alpha = g_ref[0, 0, :, :]                               # (C, TF) target face
    beta = (jnp.abs(alpha - g_ref[0, 1, :, :]) +            # rebuild:
            jnp.abs(alpha - g_ref[0, 2, :, :]) +            #   beta = sum |alpha - nbr|
            jnp.abs(alpha - g_ref[0, 3, :, :]))             # (C, TF)

    # Conv1d(k=2, s=2) over interleaved (alpha, beta) == W0@alpha + W1@beta.
    # Two accumulating dots: no (2C, TF) concat temporary.
    acc = jnp.dot(w0_ref[...], alpha, preferred_element_type=jnp.float32)
    acc = acc + jnp.dot(w1_ref[...], beta, preferred_element_type=jnp.float32)

    # conv bias + BN folded into weights/shift: epilogue = add + ReLU
    o_ref[0] = jnp.maximum(acc + shift_ref[...], 0.0).astype(o_ref.dtype)


def mesh_conv_forward(x, adj, conv_w, conv_b, bn_gamma, bn_beta, bn_mean, bn_var,
                      eps=1e-5):
    """x: (B, C, N) float32, adj: (B, F, 4) int32.  Returns (B, O, F) float32."""
    B, C, N = x.shape
    _, F, K = adj.shape
    assert K == 4
    O = conv_w.shape[0]

    vmem_limit, budget = _vmem_limits()
    TF = _select_face_tile(B, C, O, F, budget)
    n_ft = pl.cdiv(F, TF)

    # --- glue: neighbor-major gather (B, 4, C, F), write-once/read-once ------
    # (kept in XLA; see header note / TODO about in-kernel dynamic gather)
    adj_t = jnp.transpose(adj, (0, 2, 1))                     # (B, 4, F)

    def gather_b(xb, at):                                     # (C, N), (4, F)
        return jax.vmap(lambda idx: jnp.take(xb, idx, axis=1))(at)   # (4, C, F)

    gathered = jax.vmap(gather_b)(x, adj_t)                   # (B, 4, C, F)

    # --- glue: fold conv bias + BN (eval-mode) into weights and one shift ----
    scale = bn_gamma / jnp.sqrt(bn_var + eps)                 # (O,)
    w0 = conv_w[:, :, 0] * scale[:, None]                     # (O, C)
    w1 = conv_w[:, :, 1] * scale[:, None]                     # (O, C)
    shift = (bn_beta + scale * (conv_b - bn_mean)).reshape(O, 1)

    # --- Pallas: rebuild + fused conv/BN/ReLU, lane-dense (B, O, F) output ---
    out = pl.pallas_call(
        meshconv_kernel,
        out_shape=jax.ShapeDtypeStruct((B, O, F), jnp.float32),
        grid=(B, n_ft),
        in_specs=[
            pl.BlockSpec((1, 4, C, TF), lambda b, f: (b, 0, 0, f)),
            pl.BlockSpec((O, C), lambda b, f: (0, 0)),
            pl.BlockSpec((O, C), lambda b, f: (0, 0)),
            pl.BlockSpec((O, 1), lambda b, f: (0, 0)),
        ],
        out_specs=pl.BlockSpec((1, O, TF), lambda b, f: (b, 0, f)),
        compiler_params=pltpu.CompilerParams(
            dimension_semantics=("parallel", "parallel"),
            vmem_limit_bytes=vmem_limit),
    )(gathered, w0, w1, shift)

    return out                                                # no pad, no slice


def mesh_conv_reference(x, adj, conv_w, conv_b, bn_gamma, bn_beta, bn_mean,
                        bn_var, eps=1e-5):
    """Pure-JAX reference mirroring the PyTorch forward (eval-mode BN)."""
    x_t = jnp.transpose(x, (0, 2, 1))                         # (B, N, C)
    g = jax.vmap(lambda xt, a: xt[a])(x_t, adj)               # (B, F, 4, C)
    alpha = g[:, :, 0, :]
    beta = jnp.sum(jnp.abs(alpha[:, :, None, :] - g[:, :, 1:, :]), axis=2)
    conv = (jnp.einsum('bfc,oc->bfo', alpha, conv_w[:, :, 0]) +
            jnp.einsum('bfc,oc->bfo', beta, conv_w[:, :, 1]) + conv_b)
    y = (conv - bn_mean) / jnp.sqrt(bn_var + eps) * bn_gamma + bn_beta
    y = jnp.maximum(y, 0.0)
    return jnp.transpose(y, (0, 2, 1))                        # (B, O, F)


if __name__ == "__main__":
    B, C_in, C_out = 2, 4, 8
    N = 256            # faces in the mesh; adj has one row per face
    F = N

    key = jax.random.PRNGKey(0)
    kx, kadj, kw, kb, kg, kbb, km, kv = jax.random.split(key, 8)

    x = jax.random.normal(kx, (B, C_in, N), dtype=jnp.float32)

    # adj[b, f] = [f, n1, n2, n3] : target face index + 3 neighbor indices
    self_idx = jnp.broadcast_to(jnp.arange(F, dtype=jnp.int32)[None, :, None],
                                (B, F, 1))
    nbrs = jax.random.randint(kadj, (B, F, 3), 0, N, dtype=jnp.int32)
    adj = jnp.concatenate([self_idx, nbrs], axis=-1)          # (B, F, 4)

    # deterministic parameters (shapes from nn.Conv1d / nn.BatchNorm1d)
    conv_w = 0.1 * jax.random.normal(kw, (C_out, C_in, 2), dtype=jnp.float32)
    conv_b = 0.1 * jax.random.normal(kb, (C_out,), dtype=jnp.float32)
    bn_gamma = 1.0 + 0.1 * jax.random.normal(kg, (C_out,), dtype=jnp.float32)
    bn_beta = 0.1 * jax.random.normal(kbb, (C_out,), dtype=jnp.float32)
    bn_mean = 0.1 * jax.random.normal(km, (C_out,), dtype=jnp.float32)
    bn_var = 1.0 + 0.1 * jnp.abs(jax.random.normal(kv, (C_out,),
                                                   dtype=jnp.float32))

    fwd = jax.jit(mesh_conv_forward)
    out = jax.block_until_ready(fwd(x, adj, conv_w, conv_b, bn_gamma, bn_beta,
                                    bn_mean, bn_var))

    ref = mesh_conv_reference(x, adj, conv_w, conv_b, bn_gamma, bn_beta,
                              bn_mean, bn_var)
    assert out.shape == (B, C_out, F), out.shape
    assert jnp.allclose(out, ref, atol=1e-4, rtol=1e-4), \
        float(jnp.max(jnp.abs(out - ref)))

    print("KERNEL_OK")
</pallas_src>

<mosaic_0001>
module attributes {stable_mosaic.version = 11 : i64} {
  func.func @meshconv_kernel(%arg0: i32, %arg1: i32, %arg2: memref<1x4x4x256xf32, #tpu.memory_space<vmem>>, %arg3: memref<8x4xf32, #tpu.memory_space<vmem>>, %arg4: memref<8x4xf32, #tpu.memory_space<vmem>>, %arg5: memref<8x1xf32, #tpu.memory_space<vmem>>, %arg6: memref<1x8x256xf32, #tpu.memory_space<vmem>>) attributes {dimension_semantics = [#tpu.dimension_semantics<parallel>, #tpu.dimension_semantics<parallel>], iteration_bounds = array<i64: 2, 1>, scalar_prefetch = 0 : i64, scratch_operands = 0 : i64, tpu.core_type = #tpu.core_type<tc>, window_params = [{transform_indices = @transform_0, window_bounds = array<i64: 1, 4, 4, 256>}, {pipeline_mode = #tpu.pipeline_mode<synchronous>, transform_indices = @transform_1, window_bounds = array<i64: 8, 4>}, {pipeline_mode = #tpu.pipeline_mode<synchronous>, transform_indices = @transform_2, window_bounds = array<i64: 8, 4>}, {pipeline_mode = #tpu.pipeline_mode<synchronous>, transform_indices = @transform_3, window_bounds = array<i64: 8, 1>}, {transform_indices = @transform_4, window_bounds = array<i64: 1, 8, 256>}]} {
    %c0 = arith.constant 0 : index
    %c0_0 = arith.constant 0 : index
    %c0_1 = arith.constant 0 : index
    %c0_2 = arith.constant 0 : index
    %0 = vector.load %arg2[%c0, %c0_0, %c0_1, %c0_2] : memref<1x4x4x256xf32, #tpu.memory_space<vmem>>, vector<1x1x4x256xf32>
    %1 = vector.shape_cast %0 : vector<1x1x4x256xf32> to vector<4x256xf32>
    %c0_3 = arith.constant 0 : index
    %c1 = arith.constant 1 : index
    %c0_4 = arith.constant 0 : index
    %c0_5 = arith.constant 0 : index
    %2 = vector.load %arg2[%c0_3, %c1, %c0_4, %c0_5] : memref<1x4x4x256xf32, #tpu.memory_space<vmem>>, vector<1x1x4x256xf32>
    %3 = vector.shape_cast %2 : vector<1x1x4x256xf32> to vector<4x256xf32>
    %4 = arith.subf %1, %3 : vector<4x256xf32>
    %5 = math.absf %4 : vector<4x256xf32>
    %c0_6 = arith.constant 0 : index
    %c2 = arith.constant 2 : index
    %c0_7 = arith.constant 0 : index
    %c0_8 = arith.constant 0 : index
    %6 = vector.load %arg2[%c0_6, %c2, %c0_7, %c0_8] : memref<1x4x4x256xf32, #tpu.memory_space<vmem>>, vector<1x1x4x256xf32>
    %7 = vector.shape_cast %6 : vector<1x1x4x256xf32> to vector<4x256xf32>
    %8 = arith.subf %1, %7 : vector<4x256xf32>
    %9 = math.absf %8 : vector<4x256xf32>
    %10 = arith.addf %5, %9 : vector<4x256xf32>
    %c0_9 = arith.constant 0 : index
    %c3 = arith.constant 3 : index
    %c0_10 = arith.constant 0 : index
    %c0_11 = arith.constant 0 : index
    %11 = vector.load %arg2[%c0_9, %c3, %c0_10, %c0_11] : memref<1x4x4x256xf32, #tpu.memory_space<vmem>>, vector<1x1x4x256xf32>
    %12 = vector.shape_cast %11 : vector<1x1x4x256xf32> to vector<4x256xf32>
    %13 = arith.subf %1, %12 : vector<4x256xf32>
    %14 = math.absf %13 : vector<4x256xf32>
    %15 = arith.addf %10, %14 : vector<4x256xf32>
    %c0_12 = arith.constant 0 : index
    %c0_13 = arith.constant 0 : index
    %16 = vector.load %arg3[%c0_12, %c0_13] : memref<8x4xf32, #tpu.memory_space<vmem>>, vector<8x4xf32>
    %cst = arith.constant dense<0.000000e+00> : vector<8x256xf32>
    %17 = tpu.matmul %16, %1, %cst {dimension_numbers = #tpu.dot_dimension_numbers<[1], [0], [0], [1], [0, 0, 1, 1], [], []>} : vector<8x4xf32>, vector<4x256xf32>, vector<8x256xf32> -> vector<8x256xf32>
    %c0_14 = arith.constant 0 : index
    %c0_15 = arith.constant 0 : index
    %18 = vector.load %arg4[%c0_14, %c0_15] : memref<8x4xf32, #tpu.memory_space<vmem>>, vector<8x4xf32>
    %cst_16 = arith.constant dense<0.000000e+00> : vector<8x256xf32>
    %19 = tpu.matmul %18, %15, %cst_16 {dimension_numbers = #tpu.dot_dimension_numbers<[1], [0], [0], [1], [0, 0, 1, 1], [], []>} : vector<8x4xf32>, vector<4x256xf32>, vector<8x256xf32> -> vector<8x256xf32>
    %20 = arith.addf %17, %19 : vector<8x256xf32>
    %c0_17 = arith.constant 0 : index
    %c0_18 = arith.constant 0 : index
    %21 = vector.load %arg5[%c0_17, %c0_18] : memref<8x1xf32, #tpu.memory_space<vmem>>, vector<8x1xf32>
    %22 = vector.broadcast %21 : vector<8x1xf32> to vector<8x256xf32>
    %23 = arith.addf %20, %22 : vector<8x256xf32>
    %cst_19 = arith.constant 0.000000e+00 : f32
    %24 = vector.broadcast %cst_19 : f32 to vector<8x256xf32>
    %25 = arith.maximumf %23, %24 : vector<8x256xf32>
    %c0_20 = arith.constant 0 : index
    %c0_21 = arith.constant 0 : index
    %c0_22 = arith.constant 0 : index
    %26 = vector.load %arg6[%c0_20, %c0_21, %c0_22] : memref<1x8x256xf32, #tpu.memory_space<vmem>>, vector<1x8x256xf32>
    %27 = vector.shape_cast %26 : vector<1x8x256xf32> to vector<8x256xf32>
    %28 = vector.shape_cast %25 : vector<8x256xf32> to vector<1x8x256xf32>
    tpu.vector_store %arg6[%c0_20, %c0_21, %c0_22], %28 {strides = array<i32>} : memref<1x8x256xf32, #tpu.memory_space<vmem>>, vector<1x8x256xf32>,
    return
  }
  func.func @transform_0(%arg0: i32, %arg1: i32) -> (i32, i32, i32, i32) {
    %c0_i32 = arith.constant 0 : i32
    %c0_i32_0 = arith.constant 0 : i32
    %c0_i32_1 = arith.constant 0 : i32
    return %arg0, %c0_i32, %c0_i32_0, %arg1 : i32, i32, i32, i32
  }
  func.func @transform_1(%arg0: i32, %arg1: i32) -> (i32, i32) {
    %c0_i32 = arith.constant 0 : i32
    %c0_i32_0 = arith.constant 0 : i32
    %c0_i32_1 = arith.constant 0 : i32
    return %c0_i32, %c0_i32_0 : i32, i32
  }
  func.func @transform_2(%arg0: i32, %arg1: i32) -> (i32, i32) {
    %c0_i32 = arith.constant 0 : i32
    %c0_i32_0 = arith.constant 0 : i32
    %c0_i32_1 = arith.constant 0 : i32
    return %c0_i32, %c0_i32_0 : i32, i32
  }
  func.func @transform_3(%arg0: i32, %arg1: i32) -> (i32, i32) {
    %c0_i32 = arith.constant 0 : i32
    %c0_i32_0 = arith.constant 0 : i32
    %c0_i32_1 = arith.constant 0 : i32
    return %c0_i32, %c0_i32_0 : i32, i32
  }
  func.func @transform_4(%arg0: i32, %arg1: i32) -> (i32, i32, i32) {
    %c0_i32 = arith.constant 0 : i32
    %c0_i32_0 = arith.constant 0 : i32
    return %arg0, %c0_i32, %arg1 : i32, i32, i32
  }
}

</mosaic_0001>

<llo_original>
// kernel: mesh_conv_forward.1
$region0: #{mesh_conv_forward.1}
  #allocation0 [shape = 'u32[]', space=smem, size = 0x4, offset = 0x4, fixed_abs, tag = 'smem constant byte address 0x4 - core index']
  #allocation1 [shape = 'u32[144,128]{1,0:T(1,128)}', space=vmem, size = 0x12000, scoped, tag = 'internal scratch']
  %s0 = inlined_call_operand.vmem [shape: f32[2,4,4,256], index: 0, kind: input, shape index: {}]
  %s1 = inlined_call_operand.vmem [shape: f32[8,4], index: 1, kind: input, shape index: {}]
  %s2 = inlined_call_operand.vmem [shape: f32[8,4], index: 2, kind: input, shape index: {}]
  %s3 = inlined_call_operand.vmem [shape: f32[8,1], index: 3, kind: input, shape index: {}]
  %s4 = inlined_call_operand.hbm [shape: f32[2,8,256], index: 4, kind: output, shape index: {}]
  %s5 = sld [smem:[#allocation0]]
  $region49: #{mesh_conv_forward.1} parent=0
    _
  %s7 = ssub.s32 1, %s5
  %s8 = scalar_select 0, %s7, %s5
  $region1: #{mesh_conv_forward.1} parent=0
    #allocation2 [shape = 'u8[16384]{0}', space=vmem, size = 0x4000, scoped, tag = 'output window, operand 0']
    #allocation3 [shape = 's32[2]{0}', space=sflag, size = 0x8, scoped, tag = 'scoped memory for mesh_conv_forward.1']
    %9 = vsyncpa [#allocation3], 0
    %s10 = scalar_lea.sflag [#allocation3], 1
    %11 = vsyncpa %s10, 0
    loop: start=0, step=1, limit=4
    $region2: #{mesh_conv_forward.1} parent=1 // loop_pre_header
      _
    $region3: #{mesh_conv_forward.1} parent=1 // loop_header
      %s13 = sphi 0, %s17
      %p14 = scmp.ge.s32.totalorder %s13, 4
      %s20 = sphi 0, %s32
      %s21 = sphi 0, %s28
      %s22 = sphi 0, %s20
      %s23 = sphi 0, %s21
      %s24 = sphi 0, %s22
      %s25 = sphi 0, %s23
      %s37 = sphi 0, %s39
      %s40 = sphi 0, %s37
      %s41 = sphi 0, %s40
      %s57 = sphi 0, %s41
      %s61 = sphi 0, %s61
      %s63 = sphi 0, %s61
      %s64 = sphi 0, %s63
      %s78 = sphi 0, %s64
      %s82 = sphi 0, %s82
      %s84 = sphi 0, %s82
      %s85 = sphi 0, %s84
      %s99 = sphi 0, %s85
      %s103 = sphi 0, %s103
      %s105 = sphi 0, %s103
      %s106 = sphi 0, %s105
      %s120 = sphi 0, %s106
      %s128 = sphi 0, %s130
      %s131 = sphi 0, %s128
      %s132 = sphi 0, %s131
      %s148 = sphi 0, %s132
    $region4: #{mesh_conv_forward.1} parent=1 // loop_header_branch
      %16 = sbr.rel (%p14) target = $region8
    $region5: #{mesh_conv_forward.1} parent=1 // loop_body
      %s18 = ssub.s32 %s13, 1
      %s19 = ssub.s32 %s13, 2
      %s26 = sadd.s32 1, %s21
      %p27 = scmp.ge.s32.totalorder %s26, 1
      %s28 = scalar_select %p27, 0, %s26
      %s29 = sadd.s32 1, %s20
      %s30 = scalar_select %p27, %s29, %s20
      %p31 = scmp.ge.s32.totalorder %s30, 2
      %s32 = scalar_select %p31, 0, %s30
      %s33 = ssub.s32 %s20, %s32
      %s34 = ssub.s32 %s21, %s28
      %s35 = sor.u32 %s33, %s34
      %p36 = scmp.eq.s32.totalorder %s35, 0
      %s38 = sadd.s32 %s37, 1
      %s39 = scalar_select %p36, %s37, %s38
      %p42 = pneg %p36
      %p43 = scmp.eq.s32.totalorder %s13, 1
      %p44 = por %p42, %p43
      %p45 = scmp.ne.s32.totalorder %s37, %s40
      %p46 = scmp.eq.s32.totalorder %s13, 0
      %p47 = por %p45, %p46
      %p48 = scmp.ne.s32.totalorder %s37, %s40
      %p49 = scmp.eq.s32.totalorder %s18, 1
      %p50 = por %p48, %p49
      %p51 = scmp.ne.s32.totalorder %s40, %s41
      %p52 = scmp.eq.s32.totalorder %s18, 0
      %p53 = por %p51, %p52
      %p54 = scmp.ne.s32.totalorder %s40, %s41
      %p55 = scmp.eq.s32.totalorder %s19, 1
      %p56 = por %p54, %p55
      %p58 = scmp.ne.s32.totalorder %s41, %s57
      %p59 = scmp.eq.s32.totalorder %s19, 0
      %p60 = por %p58, %p59
      %s62 = sadd.s32 %s61, 1
      %p65 = scmp.eq.s32.totalorder %s13, 1
      %p66 = scmp.ne.s32.totalorder %s61, %s63
      %p67 = scmp.eq.s32.totalorder %s13, 0
      %p68 = por %p66, %p67
      %p69 = scmp.ne.s32.totalorder %s61, %s63
      %p70 = scmp.eq.s32.totalorder %s18, 1
      %p71 = por %p69, %p70
      %p72 = scmp.ne.s32.totalorder %s63, %s64
      %p73 = scmp.eq.s32.totalorder %s18, 0
      %p74 = por %p72, %p73
      %p75 = scmp.ne.s32.totalorder %s63, %s64
      %p76 = scmp.eq.s32.totalorder %s19, 1
      %p77 = por %p75, %p76
      %p79 = scmp.ne.s32.totalorder %s64, %s78
      %p80 = scmp.eq.s32.totalorder %s19, 0
      %p81 = por %p79, %p80
      %s83 = sadd.s32 %s82, 1
      %p86 = scmp.eq.s32.totalorder %s13, 1
      %p87 = scmp.ne.s32.totalorder %s82, %s84
      %p88 = scmp.eq.s32.totalorder %s13, 0
      %p89 = por %p87, %p88
      %p90 = scmp.ne.s32.totalorder %s82, %s84
      %p91 = scmp.eq.s32.totalorder %s18, 1
      %p92 = por %p90, %p91
      %p93 = scmp.ne.s32.totalorder %s84, %s85
      %p94 = scmp.eq.s32.totalorder %s18, 0
      %p95 = por %p93, %p94
      %p96 = scmp.ne.s32.totalorder %s84, %s85
      %p97 = scmp.eq.s32.totalorder %s19, 1
      %p98 = por %p96, %p97
      %p100 = scmp.ne.s32.totalorder %s85, %s99
      %p101 = scmp.eq.s32.totalorder %s19, 0
      %p102 = por %p100, %p101
      %s104 = sadd.s32 %s103, 1
      %p107 = scmp.eq.s32.totalorder %s13, 1
      %p108 = scmp.ne.s32.totalorder %s103, %s105
      %p109 = scmp.eq.s32.totalorder %s13, 0
      %p110 = por %p108, %p109
      %p111 = scmp.ne.s32.totalorder %s103, %s105
      %p112 = scmp.eq.s32.totalorder %s18, 1
      %p113 = por %p111, %p112
      %p114 = scmp.ne.s32.totalorder %s105, %s106
      %p115 = scmp.eq.s32.totalorder %s18, 0
      %p116 = por %p114, %p115
      %p117 = scmp.ne.s32.totalorder %s105, %s106
      %p118 = scmp.eq.s32.totalorder %s19, 1
      %p119 = por %p117, %p118
      %p121 = scmp.ne.s32.totalorder %s106, %s120
      %p122 = scmp.eq.s32.totalorder %s19, 0
      %p123 = por %p121, %p122
      %s124 = ssub.s32 %s20, %s32
      %s125 = ssub.s32 %s21, %s28
      %s126 = sor.u32 %s124, %s125
      %p127 = scmp.eq.s32.totalorder %s126, 0
      %s129 = sadd.s32 %s128, 1
      %s130 = scalar_select %p127, %s128, %s129
      %p133 = pneg %p127
      %p134 = scmp.eq.s32.totalorder %s13, 1
      %p135 = por %p133, %p134
      %p136 = scmp.ne.s32.totalorder %s128, %s131
      %p137 = scmp.eq.s32.totalorder %s13, 0
      %p138 = por %p136, %p137
      %p139 = scmp.ne.s32.totalorder %s128, %s131
      %p140 = scmp.eq.s32.totalorder %s18, 1
      %p141 = por %p139, %p140
      %p142 = scmp.ne.s32.totalorder %s131, %s132
      %p143 = scmp.eq.s32.totalorder %s18, 0
      %p144 = por %p142, %p143
      %p145 = scmp.ne.s32.totalorder %s131, %s132
      %p146 = scmp.eq.s32.totalorder %s19, 1
      %p147 = por %p145, %p146
      %p149 = scmp.ne.s32.totalorder %s132, %s148
      %p150 = scmp.eq.s32.totalorder %s19, 0
      %p151 = por %p149, %p150
      %p152 = scmp.le.s32.totalorder 1, %s13
      %p153 = scmp.lt.s32.totalorder %s13, 3
      %p154 = pnand %p152, %p153
      %p155 = pneg %p154
      // Predicated region
      $region9: #{mesh_conv_forward.1} parent=5 // pred_check
        _
      $region10: #{mesh_conv_forward.1} parent=5 // pred_check_branch
        %157 = sbr.rel (%p154) target = $region12
      $region11: #{mesh_conv_forward.1} parent=5 // pred_region
        %s158 = ssub.s32 %s13, 1
        // Predicated region
        $region13: #{mesh_conv_forward.1} parent=11 // pred_check
          %p159 = pneg %p74
        $region14: #{mesh_conv_forward.1} parent=11 // pred_check_branch
          %161 = sbr.rel (%p159) target = $region16
        $region15: #{mesh_conv_forward.1} parent=11 // pred_region
          _
        $region16: #{mesh_conv_forward.1} parent=11 // pred_fallthru
          _
        // Predicated region
        $region17: #{mesh_conv_forward.1} parent=11 // pred_check
          %p162 = pneg %p95
        $region18: #{mesh_conv_forward.1} parent=11 // pred_check_branch
          %164 = sbr.rel (%p162) target = $region20
        $region19: #{mesh_conv_forward.1} parent=11 // pred_region
          _
        $region20: #{mesh_conv_forward.1} parent=11 // pred_fallthru
          _
        // Predicated region
        $region21: #{mesh_conv_forward.1} parent=11 // pred_check
          %p165 = pneg %p116
        $region22: #{mesh_conv_forward.1} parent=11 // pred_check_branch
          %167 = sbr.rel (%p165) target = $region24
        $region23: #{mesh_conv_forward.1} parent=11 // pred_region
          _
        $region24: #{mesh_conv_forward.1} parent=11 // pred_fallthru
          _
      $region12: #{mesh_conv_forward.1} parent=5 // pred_fallthru
        _
      %p168 = scmp.lt.s32.totalorder %s13, 2
      // Predicated region
      $region25: #{mesh_conv_forward.1} parent=5 // pred_check
        %p169 = pneg %p168
      $region26: #{mesh_conv_forward.1} parent=5 // pred_check_branch
        %171 = sbr.rel (%p169) target = $region28
      $region27: #{mesh_conv_forward.1} parent=5 // pred_region
        // Predicated region
        $region29: #{mesh_conv_forward.1} parent=27 // pred_check
          %p172 = pneg %p47
        $region30: #{mesh_conv_forward.1} parent=27 // pred_check_branch
          %174 = sbr.rel (%p172) target = $region32
        $region31: #{mesh_conv_forward.1} parent=27 // pred_region
          %s175 = smul.u32 2, %s21
          %p176 = scmp.lt.s32.totalorder %s20, 1
          %s177 = scalar_select %p176, %s20, 1
          %p178 = scmp.lt.s32.totalorder %s175, 1
          %s179 = scalar_select %p178, %s175, 1
          %s180 = smul.addr %s177, 8
          %s181 = sadd.s32 %s179, %s180
          %s182 = smul.addr %s181, 4
          %s183 = scalar_lea.vmem %s0, %s182
          %s184 = smul.u32 2, %s21
        $region32: #{mesh_conv_forward.1} parent=27 // pred_fallthru
          _
      $region28: #{mesh_conv_forward.1} parent=5 // pred_fallthru
        _
      %p185 = scmp.le.s32.totalorder 1, %s13
      %p186 = scmp.lt.s32.totalorder %s13, 3
      %p187 = pnand %p185, %p186
      %p188 = pneg %p187
      // Predicated region
      $region33: #{mesh_conv_forward.1} parent=5 // pred_check
        _
      $region34: #{mesh_conv_forward.1} parent=5 // pred_check_branch
        %190 = sbr.rel (%p187) target = $region36
      $region35: #{mesh_conv_forward.1} parent=5 // pred_region
        %s191 = ssub.s32 %s13, 1
        %s192 = smul.u32 2, %s23
        %p193 = scmp.lt.s32.totalorder %s22, 1
        %s194 = scalar_select %p193, %s22, 1
        %p195 = scmp.lt.s32.totalorder %s192, 1
        %s196 = scalar_select %p195, %s192, 1
        %s197 = smul.addr %s194, 8
        %s198 = sadd.s32 %s196, %s197
        %s199 = smul.addr %s198, 4
        %s200 = scalar_lea.vmem %s0, %s199
        %p201 = pneg %p53
        %p202 = pneg %p50
        %p203 = pneg %p74
        %p204 = pneg %p71
        %p205 = pneg %p95
        %p206 = pneg %p92
        %p207 = pneg %p116
        %p208 = pneg %p113
        %p209 = pneg %p144
        %p210 = pneg %p141
        %s211 = sand.u32 %s131, 1
        %s212 = scalar_lea.sflag [#allocation3], %s211
        %s213 = sand.u32 %s131, 1
        %s214 = smul.addr %s213, 16
        %s215 = scalar_lea.vmem [#allocation2], %s214
        %s216 = smul.u32 2, %s23
        %p217 = scmp.lt.s32.totalorder %s22, 1
        %s218 = scalar_select %p217, %s22, 1
        %p219 = scmp.lt.s32.totalorder %s216, 1
        %s220 = scalar_select %p219, %s216, 1
        %s221 = smul.addr %s218, 8
        %s222 = sadd.s32 %s220, %s221
        %s223 = smul.addr %s222, 4
        %s224 = scalar_lea.vmem %s0, %s223
        %s225 = smul.u32 2, %s23
        %s226 = smul.u32 2, %s23
        %v227 = vld [vmem:[%s224] sm:$0xff]
        %s228 = scalar_lea.vmem %s224, 8
        %v229 = vld [vmem:[%s228] sm:$0xff]
        %v230 = vsub.f32 %v227, %v229
        %v231 = vand.u32 2147483647, %v230
        %s232 = scalar_lea.vmem %s224, 16
        %v233 = vld [vmem:[%s232] sm:$0xff]
        %v234 = vsub.f32 %v227, %v233
        %v235 = vand.u32 2147483647, %v234
        %v236 = vadd.f32 %v231, %v235
        %s237 = scalar_lea.vmem %s224, 24
        %v238 = vld [vmem:[%s237] sm:$0xff]
        %v239 = vsub.f32 %v227, %v238
        %v240 = vand.u32 2147483647, %v239
        %v241 = vadd.f32 %v236, %v240
        %v242 = vld [vmem:[%s1] sm:$0xff]
        %v243 = vld [vmem:[%s2] sm:$0xff]
        %v245 = vcombine.high %v241, %v241
        %vm246 = vcmask 31744
        %v248 = vsel %vm246, %v243, 0
        %vm250 = vcmask 1043456
        %v251 = vsel %vm250, %v241, 0
        %v253 = vsel %vm250, %v245, 0
        %255 = vmatprep.subr.mxu0 %v253
        %256 = vmatpush1.msra.mxu0 %v251
        %257 = vmatprep.subr.mxu0 0.0
        %258 = vmatpush1.msra.mxu0 0.0
        %259 = vmatprep.subr.mxu0 0.0
        %260 = vmatpush1.msra.mxu0 0.0
        %261 = vmatprep.subr.mxu0 0.0
        %262 = vmatpush1.msra.mxu0 0.0
        %263 = vmatprep.subr.mxu0 0.0
        %264 = vmatpush1.msra.mxu0 0.0
        %265 = vmatprep.subr.mxu0 0.0
        %266 = vmatpush1.msra.mxu0 0.0
        %267 = vmatprep.subr.mxu0 0.0
        %268 = vmatpush1.msra.mxu0 0.0
        %269 = vmatprep.subr.mxu0 0.0
        %270 = vmatpush1.msra.mxu0 0.0
        %271 = vmatprep.subr.mxu0 0.0
        %272 = vmatpush1.msra.mxu0 0.0
        %273 = vmatprep.subr.mxu0 0.0
        %274 = vmatpush1.msra.mxu0 0.0
        %275 = vmatprep.subr.mxu0 0.0
        %276 = vmatpush1.msra.mxu0 0.0
        %277 = vmatprep.subr.mxu0 0.0
        %278 = vmatpush1.msra.mxu0 0.0
        %279 = vmatprep.subr.mxu0 0.0
        %280 = vmatpush1.msra.mxu0 0.0
        %281 = vmatprep.subr.mxu0 0.0
        %282 = vmatpush1.msra.mxu0 0.0
        %283 = vmatprep.subr.mxu0 0.0
        %284 = vmatpush1.msra.mxu0 0.0
        %285 = vmatprep.subr.mxu0 0.0
        %286 = vmatpush1.msra.mxu0 0.0
        %287 = vmatprep.subr.mxu0 0.0
        %288 = vmatpush1.msra.mxu0 0.0
        %289 = vmatprep.subr.mxu0 0.0
        %290 = vmatpush1.msra.mxu0 0.0
        %291 = vmatprep.subr.mxu0 0.0
        %292 = vmatpush1.msra.mxu0 0.0
        %293 = vmatprep.subr.mxu0 0.0
        %294 = vmatpush1.msra.mxu0 0.0
        %295 = vmatprep.subr.mxu0 0.0
        %296 = vmatpush1.msra.mxu0 0.0
        %297 = vmatprep.subr.mxu0 0.0
        %298 = vmatpush1.msra.mxu0 0.0
        %299 = vmatprep.subr.mxu0 0.0
        %300 = vmatpush1.msra.mxu0 0.0
        %301 = vmatprep.subr.mxu0 0.0
        %302 = vmatpush1.msra.mxu0 0.0
        %303 = vmatprep.subr.mxu0 0.0
        %304 = vmatpush1.msra.mxu0 0.0
        %305 = vmatprep.subr.mxu0 0.0
        %306 = vmatpush1.msra.mxu0 0.0
        %307 = vmatprep.subr.mxu0 0.0
        %308 = vmatpush1.msra.mxu0 0.0
        %309 = vmatprep.subr.mxu0 0.0
        %310 = vmatpush1.msra.mxu0 0.0
        %311 = vmatprep.subr.mxu0 0.0
        %312 = vmatpush1.msra.mxu0 0.0
        %313 = vmatprep.subr.mxu0 0.0
        %314 = vmatpush1.msra.mxu0 0.0
        %315 = vmatprep.subr.mxu0 0.0
        %316 = vmatpush1.msra.mxu0 0.0
        %317 = vmatprep.subr.mxu0 0.0
        %318 = vmatpush1.msra.mxu0 0.0
        %319 = vmatprep.mubr.f32.mxu0 0.0
        %320 = vmatmul.mubr.f32.gmra.mrb[0].mxu0 %v248
        %v321 = vpop.f32.mrb[0].mxu0
        %v322 = vadd.f32 0.0, %v321
        %v323 = vpop.f32.mrb[0].mxu0
        %v324 = vadd.f32 0.0, %v323
        %325 = vdwg.mxu0
        %v327 = vcombine.high %v227, %v227
        %v329 = vsel %vm246, %v242, 0
        %v331 = vsel %vm250, %v227, 0
        %v333 = vsel %vm250, %v327, 0
        %335 = vmatprep.subr.mxu0 %v333
        %336 = vmatpush1.msra.mxu0 %v331
        %337 = vmatprep.subr.mxu0 0.0
        %338 = vmatpush1.msra.mxu0 0.0
        %339 = vmatprep.subr.mxu0 0.0
        %340 = vmatpush1.msra.mxu0 0.0
        %341 = vmatprep.subr.mxu0 0.0
        %342 = vmatpush1.msra.mxu0 0.0
        %343 = vmatprep.subr.mxu0 0.0
        %344 = vmatpush1.msra.mxu0 0.0
        %345 = vmatprep.subr.mxu0 0.0
        %346 = vmatpush1.msra.mxu0 0.0
        %347 = vmatprep.subr.mxu0 0.0
        %348 = vmatpush1.msra.mxu0 0.0
        %349 = vmatprep.subr.mxu0 0.0
        %350 = vmatpush1.msra.mxu0 0.0
        %351 = vmatprep.subr.mxu0 0.0
        %352 = vmatpush1.msra.mxu0 0.0
        %353 = vmatprep.subr.mxu0 0.0
        %354 = vmatpush1.msra.mxu0 0.0
        %355 = vmatprep.subr.mxu0 0.0
        %356 = vmatpush1.msra.mxu0 0.0
        %357 = vmatprep.subr.mxu0 0.0
        %358 = vmatpush1.msra.mxu0 0.0
        %359 = vmatprep.subr.mxu0 0.0
        %360 = vmatpush1.msra.mxu0 0.0
        %361 = vmatprep.subr.mxu0 0.0
        %362 = vmatpush1.msra.mxu0 0.0
        %363 = vmatprep.subr.mxu0 0.0
        %364 = vmatpush1.msra.mxu0 0.0
        %365 = vmatprep.subr.mxu0 0.0
        %366 = vmatpush1.msra.mxu0 0.0
        %367 = vmatprep.subr.mxu0 0.0
        %368 = vmatpush1.msra.mxu0 0.0
        %369 = vmatprep.subr.mxu0 0.0
        %370 = vmatpush1.msra.mxu0 0.0
        %371 = vmatprep.subr.mxu0 0.0
        %372 = vmatpush1.msra.mxu0 0.0
        %373 = vmatprep.subr.mxu0 0.0
        %374 = vmatpush1.msra.mxu0 0.0
        %375 = vmatprep.subr.mxu0 0.0
        %376 = vmatpush1.msra.mxu0 0.0
        %377 = vmatprep.subr.mxu0 0.0
        %378 = vmatpush1.msra.mxu0 0.0
        %379 = vmatprep.subr.mxu0 0.0
        %380 = vmatpush1.msra.mxu0 0.0
        %381 = vmatprep.subr.mxu0 0.0
        %382 = vmatpush1.msra.mxu0 0.0
        %383 = vmatprep.subr.mxu0 0.0
        %384 = vmatpush1.msra.mxu0 0.0
        %385 = vmatprep.subr.mxu0 0.0
        %386 = vmatpush1.msra.mxu0 0.0
        %387 = vmatprep.subr.mxu0 0.0
        %388 = vmatpush1.msra.mxu0 0.0
        %389 = vmatprep.subr.mxu0 0.0
        %390 = vmatpush1.msra.mxu0 0.0
        %391 = vmatprep.subr.mxu0 0.0
        %392 = vmatpush1.msra.mxu0 0.0
        %393 = vmatprep.subr.mxu0 0.0
        %394 = vmatpush1.msra.mxu0 0.0
        %395 = vmatprep.subr.mxu0 0.0
        %396 = vmatpush1.msra.mxu0 0.0
        %397 = vmatprep.subr.mxu0 0.0
        %398 = vmatpush1.msra.mxu0 0.0
        %399 = vmatprep.mubr.f32.mxu0 0.0
        %400 = vmatmul.mubr.f32.gmra.mrb[0].mxu0 %v329
        %v401 = vpop.f32.mrb[0].mxu0
        %v402 = vadd.f32 %v322, %v401
        %v403 = vpop.f32.mrb[0].mxu0
        %v404 = vadd.f32 %v324, %v403
        %405 = vdwg.mxu0
        %v406 = vld [vmem:[%s3] sm:$0xff]
        %408 = vset.pattern.permute.xlu0 0
        %409 = vperm.xlu0 %408, %v406
        %v410 = vpop.permute.xlu0 %409
        %v412 = vadd.f32 %v402, %v410
        %v413 = vadd.f32 %v404, %v410
        %v414 = vmax.f32 %v412, 0.0
        %v415 = vmax.f32 %v413, 0.0
        %416 = vst [vmem:[%s215] sm:$0xff] %v414
        %417 = vst [vmem:[%s215 + $0x8] sm:$0xff] %v415
        %s418 = sand.u32 %s131, 1
        %s419 = scalar_lea.sflag [#allocation3], %s418
        %s420 = sand.u32 %s131, 1
        %s421 = smul.addr %s420, 16
        %s422 = scalar_lea.vmem [#allocation2], %s421
        // Predicated region
        $region37: #{mesh_conv_forward.1} parent=35 // pred_check
          %p423 = pneg %p141
        $region38: #{mesh_conv_forward.1} parent=35 // pred_check_branch
          %425 = sbr.rel (%p423) target = $region40
        $region39: #{mesh_conv_forward.1} parent=35 // pred_region
          %s426 = smul.u32 2, %s23
          %s428 = ssub.s32 256, 256
          %429 = vsyncadd %s419, %s428
          %s430 = smul.addr %s22, 2
          %s431 = sadd.s32 %s426, %s430
          %s432 = smul.addr %s431, 128
          %s433 = scalar_lea.hbm %s4, %s432
          %s435 = sshll.u32 %s422, 4
          %s436 = int_to_ptr.vmem [resolvable:$true] %s435
          %438 = dma.vmem_to_hbm [thread:$0]  %s436, 256, %s433, %s419
        $region40: #{mesh_conv_forward.1} parent=35 // pred_fallthru
          _
      $region36: #{mesh_conv_forward.1} parent=5 // pred_fallthru
        _
      %p439 = scmp.le.s32.totalorder 2, %s13
      // Predicated region
      $region41: #{mesh_conv_forward.1} parent=5 // pred_check
        %p440 = pneg %p439
      $region42: #{mesh_conv_forward.1} parent=5 // pred_check_branch
        %442 = sbr.rel (%p440) target = $region44
      $region43: #{mesh_conv_forward.1} parent=5 // pred_region
        %s443 = ssub.s32 %s13, 2
        // Predicated region
        $region45: #{mesh_conv_forward.1} parent=43 // pred_check
          %p444 = pneg %p147
        $region46: #{mesh_conv_forward.1} parent=43 // pred_check_branch
          %446 = sbr.rel (%p444) target = $region48
        $region47: #{mesh_conv_forward.1} parent=43 // pred_region
          %s447 = sand.u32 %s132, 1
          %s448 = scalar_lea.sflag [#allocation3], %s447
          %s449 = sand.u32 %s132, 1
          %s450 = smul.addr %s449, 16
          %s451 = scalar_lea.vmem [#allocation2], %s450
          %452 = dma.done %s448, 256
        $region48: #{mesh_conv_forward.1} parent=43 // pred_fallthru
          _
      $region44: #{mesh_conv_forward.1} parent=5 // pred_fallthru
        _
    $region6: #{mesh_conv_forward.1} parent=1 // loop_footer
      %s17 = sadd.s32 1, %s13
    $region7: #{mesh_conv_forward.1} parent=1 // loop_footer_branch
      %12 = sbr.rel target = $region3
    $region8: #{mesh_conv_forward.1} parent=1 // loop_exit
      _
    %453 = vsyncpa [#allocation3], 1
    %s454 = scalar_lea.sflag [#allocation3], 1
    %455 = vsyncpa %s454, 1

</llo_original>
